<compile_context>
chip_gen: v7x
topology: tpu7x:2x2x1
jax: 0.10.0
libtpu: 0.0.40
codegen_flags: <defaults>
</compile_context>

<pallas_src>
import jax
import jax.numpy as jnp
from jax import lax
from jax.experimental import pallas as pl
from jax.experimental.pallas import tpu as pltpu


def _make_fused_gat_kernel(n_layers: int, apply_sigmoid: bool, f_pad: int):
  """Kernel computing every GAT layer (+ folded BN / ReLU / sigmoid) in one pass."""
  dn = (((1,), (1,)), ((), ()))  # contract feature axis of both operands

  def kernel(x_ref, adj_ref, w_ref, b_ref, out_ref):
    # adj[dst, src] (bf16, self-loops included) is only used as a boolean mask.
    mask = adj_ref[...] > 0                                   # [N, N] bool

    # One-hot selector (built once) that extracts the att_src column of z as a
    # [1, N] row via a single MXU op.
    lane = lax.broadcasted_iota(jnp.int32, (1, f_pad), 1)
    sel_src = (lane == (f_pad - 2)).astype(jnp.bfloat16)      # [1, F_PAD]

    hb = x_ref[...]                                           # [N, F_PAD] bf16
    h_out = None

    for l in range(n_layers):                                 # python-unrolled
      w = w_ref[l]                                            # [F_PAD, F_PAD] bf16
      bias = b_ref[l]                                         # [1, F_PAD] f32

      # Linear transform on the MXU (bf16 operands, f32 accumulate).
      # Real columns carry the (BN-scaled) features; the last two columns carry
      # the unscaled attention scores  z.att_src / z.att_dst.
      z = jnp.dot(hb, w, preferred_element_type=jnp.float32)  # [N, F_PAD] f32
      zb = z.astype(jnp.bfloat16)

      a_dst = z[:, f_pad - 1:f_pad]                           # [N, 1] f32 (free slice)
      a_src = lax.dot_general(sel_src, zb, dn,
                              preferred_element_type=jnp.float32)  # [1, N] f32

      # Attention logits, LeakyReLU(0.2), adjacency mask.
      e = a_dst + a_src                                       # [N, N] f32
      e = jnp.where(e > 0.0, e, 0.2 * e)
      e = jnp.where(mask, e, -1e30)

      # Masked softmax over source nodes (f32).  Self-loops keep the row max
      # finite, so masked entries underflow to exactly 0 after exp.
      e = e - jnp.max(e, axis=-1, keepdims=True)
      pexp = jnp.exp(e)
      denom = jnp.sum(pexp, axis=-1, keepdims=True)
      alpha = pexp * pl.reciprocal(denom, approx=True)        # [N, N]

      # Message aggregation on the MXU, then folded bias (BN shift included).
      out = jnp.dot(alpha.astype(jnp.bfloat16), zb,
                    preferred_element_type=jnp.float32)       # [N, F_PAD]
      out = out + bias

      if l < n_layers - 1:
        # BN already folded; ReLU; eval-mode dropout is the identity.
        out = jnp.maximum(out, 0.0)
        hb = out.astype(jnp.bfloat16)
      else:
        h_out = out

    if apply_sigmoid:
      h_out = jax.nn.sigmoid(h_out)
    out_ref[...] = h_out                                      # lane-dense [N, F_PAD]

  return kernel


def _pack_params(layer_params, bn_params, f_pad, eps=1e-5):
  """Fold eval-mode BN and the attention vectors into two packed slabs.

  For layer  y = alpha @ (x @ W) + bias  followed by BN(y) = y*scale + shift:
    * W's real output columns get scale folded in (scales z and the aggregate),
    * the attention columns are built from the UNSCALED W so the logits match
      the reference exactly (no division by gamma anywhere),
    * bias' = (bias - mean)*scale + beta absorbs the BN shift.
  Returns (w_all [L,F_PAD,F_PAD] bf16, b_all [L,1,F_PAD] f32).
  """
  n_layers = len(layer_params)
  w_blocks, b_blocks = [], []
  for i, (w, att_src, att_dst, bias) in enumerate(layer_params):
    f_in, f_out = w.shape
    col_src = w @ att_src.T                    # [f_in, 1], from unscaled W
    col_dst = w @ att_dst.T                    # [f_in, 1], from unscaled W
    if i < n_layers - 1 and bn_params:
      gamma, beta, mean, var = bn_params[i]
      scale = gamma * lax.rsqrt(var + eps)     # [1, f_out]
      w = w * scale
      bias = (bias - mean) * scale + beta
    w_pad = jnp.zeros((f_pad, f_pad), jnp.float32)
    w_pad = w_pad.at[:f_in, :f_out].set(w)
    w_pad = w_pad.at[:f_in, f_pad - 2:f_pad - 1].set(col_src)
    w_pad = w_pad.at[:f_in, f_pad - 1:f_pad].set(col_dst)
    b_pad = jnp.zeros((1, f_pad), jnp.float32).at[:, :f_out].set(bias)
    w_blocks.append(w_pad.astype(jnp.bfloat16))
    b_blocks.append(b_pad)
  return jnp.stack(w_blocks, axis=0), jnp.stack(b_blocks, axis=0)


def gat_custom_hidden_forward(x, adj, layer_params, bn_params, out_channels):
  """Mirrors GAT_custom_hidden.forward (eval mode, num_heads=1) in one kernel."""
  n_layers = len(layer_params)
  n, f_in0 = x.shape
  dims = [f_in0] + [w.shape[1] for (w, _, _, _) in layer_params]
  # Pad all feature dims to a multiple of 128 lanes, leaving 2 columns for the
  # folded attention vectors.
  f_pad = 128 * pl.cdiv(max(dims) + 2, 128)

  w_all, b_all = _pack_params(layer_params, bn_params, f_pad)
  x_pad = jnp.zeros((n, f_pad), jnp.bfloat16).at[:, :f_in0].set(
      x.astype(jnp.bfloat16))
  adj_b = adj.astype(jnp.bfloat16)

  kernel = _make_fused_gat_kernel(n_layers, apply_sigmoid=(out_channels == 1),
                                  f_pad=f_pad)
  vmem = pl.BlockSpec(memory_space=pltpu.MemorySpace.VMEM)
  out_pad = pl.pallas_call(
      kernel,
      out_shape=jax.ShapeDtypeStruct((n, f_pad), jnp.float32),
      in_specs=[vmem, vmem, vmem, vmem],
      out_specs=vmem,
  )(x_pad, adj_b, w_all, b_all)
  return out_pad[:, :out_channels]


# ----------------------------------------------------------------------------
# Pure-JAX reference (f32, unfolded BN) used only to validate the kernel.
# ----------------------------------------------------------------------------
def _reference_forward(x, adj, layer_params, bn_params, out_channels):
  n_layers = len(layer_params)
  mask = adj > 0
  h = x
  for i, (w, att_src, att_dst, bias) in enumerate(layer_params):
    z = h @ w
    a_dst = z @ att_dst.T                       # [N, 1]
    a_src = z @ att_src.T                       # [N, 1]
    e = a_dst + a_src.T
    e = jnp.where(e > 0, e, 0.2 * e)
    e = jnp.where(mask, e, -jnp.inf)
    alpha = jax.nn.softmax(e, axis=-1)
    out = alpha @ z + bias
    if i < n_layers - 1:
      gamma, beta, mean, var = bn_params[i]
      out = (out - mean) * lax.rsqrt(var + 1e-5) * gamma + beta
      out = jnp.maximum(out, 0.0)
    h = out
  if out_channels == 1:
    h = jax.nn.sigmoid(h)
  return h


def init_gat_params(key, f_in, f_out):
  k1, k2, k3, k4 = jax.random.split(key, 4)
  w = 0.2 * jax.random.normal(k1, (f_in, f_out), jnp.float32)
  att_src = 0.2 * jax.random.normal(k2, (1, f_out), jnp.float32)
  att_dst = 0.2 * jax.random.normal(k3, (1, f_out), jnp.float32)
  bias = 0.1 * jax.random.normal(k4, (1, f_out), jnp.float32)
  return w, att_src, att_dst, bias


def init_bn_params(key, f):
  k1, k2, k3, k4 = jax.random.split(key, 4)
  gamma = 1.0 + 0.1 * jax.random.normal(k1, (1, f), jnp.float32)
  beta = 0.1 * jax.random.normal(k2, (1, f), jnp.float32)
  mean = 0.1 * jax.random.normal(k3, (1, f), jnp.float32)
  var = 1.0 + 0.1 * jnp.abs(jax.random.normal(k4, (1, f), jnp.float32))
  return gamma, beta, mean, var


def edge_index_to_adjacency(edge_index, num_nodes):
  """Dense A[dst, src] with self-loops added (GATConv default add_self_loops=True)."""
  src = edge_index[0]
  dst = edge_index[1]
  adj = jnp.zeros((num_nodes, num_nodes), jnp.float32)
  adj = adj.at[dst, src].set(1.0)
  adj = adj.at[jnp.arange(num_nodes), jnp.arange(num_nodes)].set(1.0)
  return adj


if __name__ == "__main__":
  # Model config (small): in=8, hidden=[32, 16], out=4, num_heads=1, batchnorm=True.
  N = 16
  IN_C = 8
  HIDDEN = [32, 16]
  OUT_C = 4

  root = jax.random.PRNGKey(0)
  kx, kp = jax.random.split(root, 2)

  # Node features [N, IN_C].
  x = jax.random.normal(kx, (N, IN_C), jnp.float32)

  # Deterministic small graph: bidirectional ring, edge_index shape [2, 2N].
  idx = jnp.arange(N)
  src = jnp.concatenate([idx, (idx + 1) % N])
  dst = jnp.concatenate([(idx + 1) % N, idx])
  edge_index = jnp.stack([src, dst], axis=0)          # [2, 32]
  adj = edge_index_to_adjacency(edge_index, N)        # [N, N]

  # Parameters (deterministic, synthetic).
  dims = [IN_C] + HIDDEN + [OUT_C]
  layer_params = []
  bn_params = []
  keys = jax.random.split(kp, 2 * len(dims))
  for li in range(len(dims) - 1):
    layer_params.append(init_gat_params(keys[2 * li], dims[li], dims[li + 1]))
    if li < len(dims) - 2:
      bn_params.append(init_bn_params(keys[2 * li + 1], dims[li + 1]))

  out = gat_custom_hidden_forward(x, adj, layer_params, bn_params, OUT_C)
  out = jax.block_until_ready(out)

  ref = _reference_forward(x, adj, layer_params, bn_params, OUT_C)
  assert out.shape == (N, OUT_C)
  assert jnp.all(jnp.isfinite(out))
  # bf16 MXU operands -> loose but meaningful tolerance vs. the f32 reference.
  assert jnp.allclose(out, ref, atol=7.5e-2, rtol=7.5e-2)
  print("KERNEL_OK")
</pallas_src>

<mosaic_0001>
module attributes {stable_mosaic.version = 11 : i64} {
  func.func @kernel(%arg0: memref<16x128xbf16, #tpu.memory_space<vmem>>, %arg1: memref<16x16xbf16, #tpu.memory_space<vmem>>, %arg2: memref<3x128x128xbf16, #tpu.memory_space<vmem>>, %arg3: memref<3x1x128xf32, #tpu.memory_space<vmem>>, %arg4: memref<16x128xf32, #tpu.memory_space<vmem>>) attributes {dimension_semantics = [], scalar_prefetch = 0 : i64, scratch_operands = 0 : i64, tpu.core_type = #tpu.core_type<tc>} {
    %c0 = arith.constant 0 : index
    %c0_0 = arith.constant 0 : index
    %0 = vector.load %arg1[%c0, %c0_0] : memref<16x16xbf16, #tpu.memory_space<vmem>>, vector<16x16xbf16>
    %cst = arith.constant 0.000000e+00 : bf16
    %1 = vector.broadcast %cst : bf16 to vector<16x16xbf16>
    %2 = arith.cmpf ogt, %0, %1 : vector<16x16xbf16>
    %3 = tpu.iota {dimensions = array<i32: 1>} : vector<1x128xi32>
    %c126_i32 = arith.constant 126 : i32
    %4 = vector.broadcast %c126_i32 : i32 to vector<1x128xi32>
    %5 = arith.cmpi eq, %3, %4 : vector<1x128xi32>
    %6 = arith.extui %5 : vector<1x128xi1> to vector<1x128xi32>
    %7 = arith.sitofp %6 : vector<1x128xi32> to vector<1x128xf32>
    %8 = arith.truncf %7 : vector<1x128xf32> to vector<1x128xbf16>
    %c0_1 = arith.constant 0 : index
    %c0_2 = arith.constant 0 : index
    %9 = vector.load %arg0[%c0_1, %c0_2] : memref<16x128xbf16, #tpu.memory_space<vmem>>, vector<16x128xbf16>
    %c0_3 = arith.constant 0 : index
    %c0_4 = arith.constant 0 : index
    %c0_5 = arith.constant 0 : index
    %10 = vector.load %arg2[%c0_3, %c0_4, %c0_5] : memref<3x128x128xbf16, #tpu.memory_space<vmem>>, vector<1x128x128xbf16>
    %11 = vector.shape_cast %10 : vector<1x128x128xbf16> to vector<128x128xbf16>
    %c0_6 = arith.constant 0 : index
    %c0_7 = arith.constant 0 : index
    %c0_8 = arith.constant 0 : index
    %12 = vector.load %arg3[%c0_6, %c0_7, %c0_8] : memref<3x1x128xf32, #tpu.memory_space<vmem>>, vector<1x1x128xf32>
    %13 = vector.shape_cast %12 : vector<1x1x128xf32> to vector<1x128xf32>
    %cst_9 = arith.constant dense<0.000000e+00> : vector<16x128xf32>
    %14 = tpu.matmul %9, %11, %cst_9 {dimension_numbers = #tpu.dot_dimension_numbers<[1], [0], [0], [1], [0, 0, 1, 1], [], []>} : vector<16x128xbf16>, vector<128x128xbf16>, vector<16x128xf32> -> vector<16x128xf32>
    %15 = arith.truncf %14 : vector<16x128xf32> to vector<16x128xbf16>
    %16 = vector.extract_strided_slice %14 {offsets = [0, 127], sizes = [16, 1], strides = [1, 1]} : vector<16x128xf32> to vector<16x1xf32>
    %cst_10 = arith.constant dense<0.000000e+00> : vector<1x16xf32>
    %17 = tpu.matmul %8, %15, %cst_10 {dimension_numbers = #tpu.dot_dimension_numbers<[1], [1], [0], [0], [0, 0, 1, 0], [], []>} : vector<1x128xbf16>, vector<16x128xbf16>, vector<1x16xf32> -> vector<1x16xf32>
    %18 = vector.broadcast %16 : vector<16x1xf32> to vector<16x16xf32>
    %19 = vector.broadcast %17 : vector<1x16xf32> to vector<16x16xf32>
    %20 = arith.addf %18, %19 : vector<16x16xf32>
    %cst_11 = arith.constant 0.000000e+00 : f32
    %21 = vector.broadcast %cst_11 : f32 to vector<16x16xf32>
    %22 = arith.cmpf ogt, %20, %21 : vector<16x16xf32>
    %cst_12 = arith.constant 2.000000e-01 : f32
    %23 = vector.broadcast %cst_12 : f32 to vector<16x16xf32>
    %24 = arith.mulf %23, %20 : vector<16x16xf32>
    %25 = arith.select %22, %20, %24 : vector<16x16xi1>, vector<16x16xf32>
    %cst_13 = arith.constant -1.000000e+30 : f32
    %26 = vector.broadcast %cst_13 : f32 to vector<16x16xf32>
    %27 = arith.select %2, %25, %26 : vector<16x16xi1>, vector<16x16xf32>
    %cst_14 = arith.constant dense<0xFF800000> : vector<16xf32>
    %28 = vector.multi_reduction <maximumf>, %27, %cst_14 [1] : vector<16x16xf32> to vector<16xf32>
    %29 = vector.shape_cast %28 : vector<16xf32> to vector<16x1xf32>
    %30 = vector.broadcast %29 : vector<16x1xf32> to vector<16x16xf32>
    %31 = arith.subf %27, %30 : vector<16x16xf32>
    %32 = math.exp %31 : vector<16x16xf32>
    %cst_15 = arith.constant dense<0.000000e+00> : vector<16xf32>
    %33 = vector.multi_reduction <add>, %32, %cst_15 [1] : vector<16x16xf32> to vector<16xf32>
    %34 = vector.shape_cast %33 : vector<16xf32> to vector<16x1xf32>
    %35 = tpu.reciprocal %34 {approx = true} : vector<16x1xf32> -> vector<16x1xf32>
    %36 = vector.broadcast %35 : vector<16x1xf32> to vector<16x16xf32>
    %37 = arith.mulf %32, %36 : vector<16x16xf32>
    %38 = arith.truncf %37 : vector<16x16xf32> to vector<16x16xbf16>
    %cst_16 = arith.constant dense<0.000000e+00> : vector<16x128xf32>
    %39 = tpu.matmul %38, %15, %cst_16 {dimension_numbers = #tpu.dot_dimension_numbers<[1], [0], [0], [1], [0, 0, 1, 1], [], []>} : vector<16x16xbf16>, vector<16x128xbf16>, vector<16x128xf32> -> vector<16x128xf32>
    %40 = vector.broadcast %13 : vector<1x128xf32> to vector<16x128xf32>
    %41 = arith.addf %39, %40 : vector<16x128xf32>
    %cst_17 = arith.constant 0.000000e+00 : f32
    %42 = vector.broadcast %cst_17 : f32 to vector<16x128xf32>
    %43 = arith.maximumf %41, %42 : vector<16x128xf32>
    %44 = arith.truncf %43 : vector<16x128xf32> to vector<16x128xbf16>
    %c1 = arith.constant 1 : index
    %c0_18 = arith.constant 0 : index
    %c0_19 = arith.constant 0 : index
    %45 = vector.load %arg2[%c1, %c0_18, %c0_19] : memref<3x128x128xbf16, #tpu.memory_space<vmem>>, vector<1x128x128xbf16>
    %46 = vector.shape_cast %45 : vector<1x128x128xbf16> to vector<128x128xbf16>
    %c1_20 = arith.constant 1 : index
    %c0_21 = arith.constant 0 : index
    %c0_22 = arith.constant 0 : index
    %47 = vector.load %arg3[%c1_20, %c0_21, %c0_22] : memref<3x1x128xf32, #tpu.memory_space<vmem>>, vector<1x1x128xf32>
    %48 = vector.shape_cast %47 : vector<1x1x128xf32> to vector<1x128xf32>
    %cst_23 = arith.constant dense<0.000000e+00> : vector<16x128xf32>
    %49 = tpu.matmul %44, %46, %cst_23 {dimension_numbers = #tpu.dot_dimension_numbers<[1], [0], [0], [1], [0, 0, 1, 1], [], []>} : vector<16x128xbf16>, vector<128x128xbf16>, vector<16x128xf32> -> vector<16x128xf32>
    %50 = arith.truncf %49 : vector<16x128xf32> to vector<16x128xbf16>
    %51 = vector.extract_strided_slice %49 {offsets = [0, 127], sizes = [16, 1], strides = [1, 1]} : vector<16x128xf32> to vector<16x1xf32>
    %cst_24 = arith.constant dense<0.000000e+00> : vector<1x16xf32>
    %52 = tpu.matmul %8, %50, %cst_24 {dimension_numbers = #tpu.dot_dimension_numbers<[1], [1], [0], [0], [0, 0, 1, 0], [], []>} : vector<1x128xbf16>, vector<16x128xbf16>, vector<1x16xf32> -> vector<1x16xf32>
    %53 = vector.broadcast %51 : vector<16x1xf32> to vector<16x16xf32>
    %54 = vector.broadcast %52 : vector<1x16xf32> to vector<16x16xf32>
    %55 = arith.addf %53, %54 : vector<16x16xf32>
    %cst_25 = arith.constant 0.000000e+00 : f32
    %56 = vector.broadcast %cst_25 : f32 to vector<16x16xf32>
    %57 = arith.cmpf ogt, %55, %56 : vector<16x16xf32>
    %cst_26 = arith.constant 2.000000e-01 : f32
    %58 = vector.broadcast %cst_26 : f32 to vector<16x16xf32>
    %59 = arith.mulf %58, %55 : vector<16x16xf32>
    %60 = arith.select %57, %55, %59 : vector<16x16xi1>, vector<16x16xf32>
    %cst_27 = arith.constant -1.000000e+30 : f32
    %61 = vector.broadcast %cst_27 : f32 to vector<16x16xf32>
    %62 = arith.select %2, %60, %61 : vector<16x16xi1>, vector<16x16xf32>
    %cst_28 = arith.constant dense<0xFF800000> : vector<16xf32>
    %63 = vector.multi_reduction <maximumf>, %62, %cst_28 [1] : vector<16x16xf32> to vector<16xf32>
    %64 = vector.shape_cast %63 : vector<16xf32> to vector<16x1xf32>
    %65 = vector.broadcast %64 : vector<16x1xf32> to vector<16x16xf32>
    %66 = arith.subf %62, %65 : vector<16x16xf32>
    %67 = math.exp %66 : vector<16x16xf32>
    %cst_29 = arith.constant dense<0.000000e+00> : vector<16xf32>
    %68 = vector.multi_reduction <add>, %67, %cst_29 [1] : vector<16x16xf32> to vector<16xf32>
    %69 = vector.shape_cast %68 : vector<16xf32> to vector<16x1xf32>
    %70 = tpu.reciprocal %69 {approx = true} : vector<16x1xf32> -> vector<16x1xf32>
    %71 = vector.broadcast %70 : vector<16x1xf32> to vector<16x16xf32>
    %72 = arith.mulf %67, %71 : vector<16x16xf32>
    %73 = arith.truncf %72 : vector<16x16xf32> to vector<16x16xbf16>
    %cst_30 = arith.constant dense<0.000000e+00> : vector<16x128xf32>
    %74 = tpu.matmul %73, %50, %cst_30 {dimension_numbers = #tpu.dot_dimension_numbers<[1], [0], [0], [1], [0, 0, 1, 1], [], []>} : vector<16x16xbf16>, vector<16x128xbf16>, vector<16x128xf32> -> vector<16x128xf32>
    %75 = vector.broadcast %48 : vector<1x128xf32> to vector<16x128xf32>
    %76 = arith.addf %74, %75 : vector<16x128xf32>
    %cst_31 = arith.constant 0.000000e+00 : f32
    %77 = vector.broadcast %cst_31 : f32 to vector<16x128xf32>
    %78 = arith.maximumf %76, %77 : vector<16x128xf32>
    %79 = arith.truncf %78 : vector<16x128xf32> to vector<16x128xbf16>
    %c2 = arith.constant 2 : index
    %c0_32 = arith.constant 0 : index
    %c0_33 = arith.constant 0 : index
    %80 = vector.load %arg2[%c2, %c0_32, %c0_33] : memref<3x128x128xbf16, #tpu.memory_space<vmem>>, vector<1x128x128xbf16>
    %81 = vector.shape_cast %80 : vector<1x128x128xbf16> to vector<128x128xbf16>
    %c2_34 = arith.constant 2 : index
    %c0_35 = arith.constant 0 : index
    %c0_36 = arith.constant 0 : index
    %82 = vector.load %arg3[%c2_34, %c0_35, %c0_36] : memref<3x1x128xf32, #tpu.memory_space<vmem>>, vector<1x1x128xf32>
    %83 = vector.shape_cast %82 : vector<1x1x128xf32> to vector<1x128xf32>
    %cst_37 = arith.constant dense<0.000000e+00> : vector<16x128xf32>
    %84 = tpu.matmul %79, %81, %cst_37 {dimension_numbers = #tpu.dot_dimension_numbers<[1], [0], [0], [1], [0, 0, 1, 1], [], []>} : vector<16x128xbf16>, vector<128x128xbf16>, vector<16x128xf32> -> vector<16x128xf32>
    %85 = arith.truncf %84 : vector<16x128xf32> to vector<16x128xbf16>
    %86 = vector.extract_strided_slice %84 {offsets = [0, 127], sizes = [16, 1], strides = [1, 1]} : vector<16x128xf32> to vector<16x1xf32>
    %cst_38 = arith.constant dense<0.000000e+00> : vector<1x16xf32>
    %87 = tpu.matmul %8, %85, %cst_38 {dimension_numbers = #tpu.dot_dimension_numbers<[1], [1], [0], [0], [0, 0, 1, 0], [], []>} : vector<1x128xbf16>, vector<16x128xbf16>, vector<1x16xf32> -> vector<1x16xf32>
    %88 = vector.broadcast %86 : vector<16x1xf32> to vector<16x16xf32>
    %89 = vector.broadcast %87 : vector<1x16xf32> to vector<16x16xf32>
    %90 = arith.addf %88, %89 : vector<16x16xf32>
    %cst_39 = arith.constant 0.000000e+00 : f32
    %91 = vector.broadcast %cst_39 : f32 to vector<16x16xf32>
    %92 = arith.cmpf ogt, %90, %91 : vector<16x16xf32>
    %cst_40 = arith.constant 2.000000e-01 : f32
    %93 = vector.broadcast %cst_40 : f32 to vector<16x16xf32>
    %94 = arith.mulf %93, %90 : vector<16x16xf32>
    %95 = arith.select %92, %90, %94 : vector<16x16xi1>, vector<16x16xf32>
    %cst_41 = arith.constant -1.000000e+30 : f32
    %96 = vector.broadcast %cst_41 : f32 to vector<16x16xf32>
    %97 = arith.select %2, %95, %96 : vector<16x16xi1>, vector<16x16xf32>
    %cst_42 = arith.constant dense<0xFF800000> : vector<16xf32>
    %98 = vector.multi_reduction <maximumf>, %97, %cst_42 [1] : vector<16x16xf32> to vector<16xf32>
    %99 = vector.shape_cast %98 : vector<16xf32> to vector<16x1xf32>
    %100 = vector.broadcast %99 : vector<16x1xf32> to vector<16x16xf32>
    %101 = arith.subf %97, %100 : vector<16x16xf32>
    %102 = math.exp %101 : vector<16x16xf32>
    %cst_43 = arith.constant dense<0.000000e+00> : vector<16xf32>
    %103 = vector.multi_reduction <add>, %102, %cst_43 [1] : vector<16x16xf32> to vector<16xf32>
    %104 = vector.shape_cast %103 : vector<16xf32> to vector<16x1xf32>
    %105 = tpu.reciprocal %104 {approx = true} : vector<16x1xf32> -> vector<16x1xf32>
    %106 = vector.broadcast %105 : vector<16x1xf32> to vector<16x16xf32>
    %107 = arith.mulf %102, %106 : vector<16x16xf32>
    %108 = arith.truncf %107 : vector<16x16xf32> to vector<16x16xbf16>
    %cst_44 = arith.constant dense<0.000000e+00> : vector<16x128xf32>
    %109 = tpu.matmul %108, %85, %cst_44 {dimension_numbers = #tpu.dot_dimension_numbers<[1], [0], [0], [1], [0, 0, 1, 1], [], []>} : vector<16x16xbf16>, vector<16x128xbf16>, vector<16x128xf32> -> vector<16x128xf32>
    %110 = vector.broadcast %83 : vector<1x128xf32> to vector<16x128xf32>
    %111 = arith.addf %109, %110 : vector<16x128xf32>
    %c0_45 = arith.constant 0 : index
    %c0_46 = arith.constant 0 : index
    %112 = vector.load %arg4[%c0_45, %c0_46] : memref<16x128xf32, #tpu.memory_space<vmem>>, vector<16x128xf32>
    tpu.vector_store %arg4[%c0_45, %c0_46], %111 {strides = array<i32>} : memref<16x128xf32, #tpu.memory_space<vmem>>, vector<16x128xf32>,
    return
  }
}

</mosaic_0001>

<llo_original>
// kernel: tpu_custom_call.1
$region0: #{tpu_custom_call.1}
  #allocation0 [shape = 'u32[]', space=smem, size = 0x4, offset = 0x4, fixed_abs, tag = 'smem constant byte address 0x4 - core index']
  #allocation1 [shape = 'u32[144,128]{1,0:T(1,128)}', space=vmem, size = 0x12000, scoped, tag = 'internal scratch']
  %s0 = inlined_call_operand.hbm [shape: bf16[16,128], index: 0, kind: input, shape index: {}]
  %s1 = inlined_call_operand.hbm [shape: bf16[16,16], index: 1, kind: input, shape index: {}]
  %s2 = inlined_call_operand.hbm [shape: bf16[3,128,128], index: 2, kind: input, shape index: {}]
  %s3 = inlined_call_operand.vmem [shape: f32[3,1,128], index: 3, kind: input, shape index: {}]
  %s4 = inlined_call_operand.hbm [shape: f32[16,128], index: 4, kind: output, shape index: {}]
  %s5 = sld [smem:[#allocation0]]
  $region38: #{tpu_custom_call.1} parent=0
    _
  %s7 = ssub.s32 1, %s5
  %s8 = scalar_select 0, %s7, %s5
  $region1: #{tpu_custom_call.1} parent=0
    #allocation2 [shape = 'u8[4096]{0}', space=vmem, size = 0x1000, scoped, tag = 'input window, operand 0, single buffered']
    #allocation3 [shape = 's32[1]{0}', space=sflag, size = 0x4, scoped, tag = 'scoped memory for tpu_custom_call.1']
    #allocation4 [shape = 's32[1]{0}', space=sflag, size = 0x4, scoped, tag = 'scoped memory for tpu_custom_call.1']
    #allocation5 [shape = 'u8[4096]{0}', space=vmem, size = 0x1000, scoped, tag = 'input window, operand 1, single buffered']
    #allocation6 [shape = 's32[1]{0}', space=sflag, size = 0x4, scoped, tag = 'scoped memory for tpu_custom_call.1']
    #allocation7 [shape = 'u8[98304]{0}', space=vmem, size = 0x18000, scoped, tag = 'input window, operand 2, single buffered']
    #allocation8 [shape = 'u8[8192]{0}', space=vmem, size = 0x2000, scoped, tag = 'output window, operand 0, single buffered']
    %9 = vsyncpa [#allocation3], 0
    %10 = vsyncpa [#allocation6], 0
    %11 = vsyncpa [#allocation4], 0
    // Predicated region
    $region2: #{tpu_custom_call.1} parent=1 // pred_check
      _
    $region3: #{tpu_custom_call.1} parent=1 // pred_check_branch
      %13 = sbr.rel (0) target = $region5
    $region4: #{tpu_custom_call.1} parent=1 // pred_region
      %s15 = ssub.s32 128, 128
      %16 = vsyncadd [#allocation3], %s15
      %s17 = sshll.u32 [#allocation2], 4
      %s18 = int_to_ptr.vmem [resolvable:$true] %s17
      %23 = dma.hbm_to_vmem [thread:$0]  %s0, 128, %s18, [#allocation3], 64, 64, 4
    $region5: #{tpu_custom_call.1} parent=1 // pred_fallthru
      _
    // Predicated region
    $region6: #{tpu_custom_call.1} parent=1 // pred_check
      _
    $region7: #{tpu_custom_call.1} parent=1 // pred_check_branch
      %25 = sbr.rel (0) target = $region9
    $region8: #{tpu_custom_call.1} parent=1 // pred_region
      %s27 = ssub.s32 128, 128
      %28 = vsyncadd [#allocation6], %s27
      %s29 = sshll.u32 [#allocation5], 4
      %s30 = int_to_ptr.vmem [resolvable:$true] %s29
      %35 = dma.hbm_to_vmem [thread:$0]  %s1, 128, %s30, [#allocation6], 64, 64, 4
    $region9: #{tpu_custom_call.1} parent=1 // pred_fallthru
      _
    // Predicated region
    $region10: #{tpu_custom_call.1} parent=1 // pred_check
      _
    $region11: #{tpu_custom_call.1} parent=1 // pred_check_branch
      %37 = sbr.rel (0) target = $region13
    $region12: #{tpu_custom_call.1} parent=1 // pred_region
      %s39 = ssub.s32 3072, 3072
      %40 = vsyncadd [#allocation6], %s39
      %s41 = sshll.u32 [#allocation7], 4
      %s42 = int_to_ptr.vmem [resolvable:$true] %s41
      %47 = dma.hbm_to_vmem [thread:$0]  %s2, 3072, %s42, [#allocation6], 64, 64, 4
    $region13: #{tpu_custom_call.1} parent=1 // pred_fallthru
      _
    // Predicated region
    $region14: #{tpu_custom_call.1} parent=1 // pred_check
      _
    $region15: #{tpu_custom_call.1} parent=1 // pred_check_branch
      %49 = sbr.rel (0) target = $region17
    $region16: #{tpu_custom_call.1} parent=1 // pred_region
      _
    $region17: #{tpu_custom_call.1} parent=1 // pred_fallthru
      _
    // Predicated region
    $region18: #{tpu_custom_call.1} parent=1 // pred_check
      _
    $region19: #{tpu_custom_call.1} parent=1 // pred_check_branch
      %51 = sbr.rel (0) target = $region21
    $region20: #{tpu_custom_call.1} parent=1 // pred_region
      %52 = dma.done [#allocation3], 128
    $region21: #{tpu_custom_call.1} parent=1 // pred_fallthru
      _
    // Predicated region
    $region22: #{tpu_custom_call.1} parent=1 // pred_check
      _
    $region23: #{tpu_custom_call.1} parent=1 // pred_check_branch
      %54 = sbr.rel (0) target = $region25
    $region24: #{tpu_custom_call.1} parent=1 // pred_region
      %55 = dma.done [#allocation6], 128
    $region25: #{tpu_custom_call.1} parent=1 // pred_fallthru
      _
    // Predicated region
    $region26: #{tpu_custom_call.1} parent=1 // pred_check
      _
    $region27: #{tpu_custom_call.1} parent=1 // pred_check_branch
      %57 = sbr.rel (0) target = $region29
    $region28: #{tpu_custom_call.1} parent=1 // pred_region
      %58 = dma.done [#allocation6], 3072
    $region29: #{tpu_custom_call.1} parent=1 // pred_fallthru
      _
    %v62 = vld [vmem:[#allocation5] sm:$0xf]
    %v63 = vld [vmem:[#allocation5 + $0x4] sm:$0xf]
    %vm64 = vcmp.gt.bf16.partialorder %v62, 0
    %vm65 = vcmp.gt.bf16.partialorder %v63, 0
    %v66 = vlaneseq
    %v67 = vand.u32 %v66, 127
    %vm68 = vcmp.eq.s32.totalorder %v67, 126
    %v69 = vsel %vm68, 1, 0
    %v70 = vcvt.s32.f32 %v69
    %v71 = vpack.c.bf16 %v70, %v70
    %v72 = vld [vmem:[#allocation2] sm:$0xf]
    %v73 = vld [vmem:[#allocation2 + $0x4] sm:$0xf]
    %v74 = vld [vmem:[#allocation7] sm:$0xf]
    %v75 = vld [vmem:[#allocation7 + $0x4] sm:$0xf]
    %v76 = vld [vmem:[#allocation7 + $0x8] sm:$0xf]
    %v77 = vld [vmem:[#allocation7 + $0xc] sm:$0xf]
    %v78 = vld [vmem:[#allocation7 + $0x10] sm:$0xf]
    %v79 = vld [vmem:[#allocation7 + $0x14] sm:$0xf]
    %v80 = vld [vmem:[#allocation7 + $0x18] sm:$0xf]
    %v81 = vld [vmem:[#allocation7 + $0x1c] sm:$0xf]
    %v82 = vld [vmem:[#allocation7 + $0x20] sm:$0xf]
    %v83 = vld [vmem:[#allocation7 + $0x24] sm:$0xf]
    %v84 = vld [vmem:[#allocation7 + $0x28] sm:$0xf]
    %v85 = vld [vmem:[#allocation7 + $0x2c] sm:$0xf]
    %v86 = vld [vmem:[#allocation7 + $0x30] sm:$0xf]
    %v87 = vld [vmem:[#allocation7 + $0x34] sm:$0xf]
    %v88 = vld [vmem:[#allocation7 + $0x38] sm:$0xf]
    %v89 = vld [vmem:[#allocation7 + $0x3c] sm:$0xf]
    %v90 = vld [vmem:[%s3] sm:$0x1]
    %v93 = vunpack.c.l.b16 %v72
    %v94 = vunpack.c.l.b16 %v73
    %v95 = vpack.c.b16 %v94, %v93
    %v113 = vunpack.c.l.b16 %v74
    %v114 = vunpack.c.l.b16 %v75
    %v115 = vunpack.c.l.b16 %v76
    %v116 = vunpack.c.l.b16 %v77
    %v117 = vunpack.c.l.b16 %v78
    %v118 = vunpack.c.l.b16 %v79
    %v119 = vunpack.c.l.b16 %v80
    %v120 = vunpack.c.l.b16 %v81
    %v121 = vunpack.c.l.b16 %v82
    %v122 = vunpack.c.l.b16 %v83
    %v123 = vunpack.c.l.b16 %v84
    %v124 = vunpack.c.l.b16 %v85
    %v125 = vunpack.c.l.b16 %v86
    %v126 = vunpack.c.l.b16 %v87
    %v127 = vunpack.c.l.b16 %v88
    %v128 = vunpack.c.l.b16 %v89
    %v129 = vpack.c.b16 %v114, %v113
    %v130 = vpack.c.b16 %v116, %v115
    %v131 = vpack.c.b16 %v118, %v117
    %v132 = vpack.c.b16 %v120, %v119
    %v133 = vpack.c.b16 %v122, %v121
    %v134 = vpack.c.b16 %v124, %v123
    %v135 = vpack.c.b16 %v126, %v125
    %v136 = vpack.c.b16 %v128, %v127
    %145 = vmatprep.subr.bf16.mxu0 0
    %146 = vmatpush1.bf16.msra.mxu0 %v129
    %147 = vmatprep.subr.bf16.mxu0 0
    %148 = vmatpush1.bf16.msra.mxu0 %v130
    %149 = vmatprep.subr.bf16.mxu0 0
    %150 = vmatpush1.bf16.msra.mxu0 %v131
    %151 = vmatprep.subr.bf16.mxu0 0
    %152 = vmatpush1.bf16.msra.mxu0 %v132
    %153 = vmatprep.subr.bf16.mxu0 0
    %154 = vmatpush1.bf16.msra.mxu0 %v133
    %155 = vmatprep.subr.bf16.mxu0 0
    %156 = vmatpush1.bf16.msra.mxu0 %v134
    %157 = vmatprep.subr.bf16.mxu0 0
    %158 = vmatpush1.bf16.msra.mxu0 %v135
    %159 = vmatprep.subr.bf16.mxu0 0
    %160 = vmatpush1.bf16.msra.mxu0 %v136
    %161 = vmatprep.subr.bf16.mxu0 0
    %162 = vmatpush1.bf16.msra.mxu0 0
    %163 = vmatprep.subr.bf16.mxu0 0
    %164 = vmatpush1.bf16.msra.mxu0 0
    %165 = vmatprep.subr.bf16.mxu0 0
    %166 = vmatpush1.bf16.msra.mxu0 0
    %167 = vmatprep.subr.bf16.mxu0 0
    %168 = vmatpush1.bf16.msra.mxu0 0
    %169 = vmatprep.subr.bf16.mxu0 0
    %170 = vmatpush1.bf16.msra.mxu0 0
    %171 = vmatprep.subr.bf16.mxu0 0
    %172 = vmatpush1.bf16.msra.mxu0 0
    %173 = vmatprep.subr.bf16.mxu0 0
    %174 = vmatpush1.bf16.msra.mxu0 0
    %175 = vmatprep.subr.bf16.mxu0 0
    %176 = vmatpush1.bf16.msra.mxu0 0
    %177 = vmatprep.mubr.bf16.mxu0 0
    %178 = vmatmul.mubr.bf16.gmra.mrb[0].mxu0 %v95
    %v179 = vpop.f32.mrb[0].mxu0
    %v180 = vadd.f32 0.0, %v179
    %v181 = vpop.f32.mrb[0].mxu0
    %v182 = vpop.f32.mrb[0].mxu0
    %v183 = vadd.f32 0.0, %v182
    %v184 = vpop.f32.mrb[0].mxu0
    %185 = vdwg.mxu0
    %v186 = vpack.c.bf16 %v183, %v180
    %187 = vmatprep.subr.bf16.mxu0 0
    %188 = vmatpush1.bf16.xpose.msra.mxu0 %v186
    %189 = vmatprep.subr.bf16.mxu0 0
    %190 = vmatpush1.bf16.xpose.msra.mxu0 0
    %191 = vmatprep.subr.bf16.mxu0 0
    %192 = vmatpush1.bf16.xpose.msra.mxu0 0
    %193 = vmatprep.subr.bf16.mxu0 0
    %194 = vmatpush1.bf16.xpose.msra.mxu0 0
    %195 = vmatprep.subr.bf16.mxu0 0
    %196 = vmatpush1.bf16.xpose.msra.mxu0 0
    %197 = vmatprep.subr.bf16.mxu0 0
    %198 = vmatpush1.bf16.xpose.msra.mxu0 0
    %199 = vmatprep.subr.bf16.mxu0 0
    %200 = vmatpush1.bf16.xpose.msra.mxu0 0
    %201 = vmatprep.subr.bf16.mxu0 0
    %202 = vmatpush1.bf16.xpose.msra.mxu0 0
    %203 = vmatprep.subr.bf16.mxu0 0
    %204 = vmatpush1.bf16.xpose.msra.mxu0 0
    %205 = vmatprep.subr.bf16.mxu0 0
    %206 = vmatpush1.bf16.xpose.msra.mxu0 0
    %207 = vmatprep.subr.bf16.mxu0 0
    %208 = vmatpush1.bf16.xpose.msra.mxu0 0
    %209 = vmatprep.subr.bf16.mxu0 0
    %210 = vmatpush1.bf16.xpose.msra.mxu0 0
    %211 = vmatprep.subr.bf16.mxu0 0
    %212 = vmatpush1.bf16.xpose.msra.mxu0 0
    %213 = vmatprep.subr.bf16.mxu0 0
    %214 = vmatpush1.bf16.xpose.msra.mxu0 0
    %215 = vmatprep.subr.bf16.mxu0 0
    %216 = vmatpush1.bf16.xpose.msra.mxu0 0
    %217 = vmatprep.subr.bf16.mxu0 0
    %218 = vmatpush1.bf16.xpose.msra.mxu0 0
    %219 = vmatprep.mubr.bf16.mxu0 0
    %220 = vmatmul.mubr.bf16.gmra.mrb[0].mxu0 %v71
    %v221 = vpop.f32.mrb[0].mxu0
    %v222 = vadd.f32 0.0, %v221
    %v223 = vpop.f32.mrb[0].mxu0
    %v224 = vpop.f32.mrb[0].mxu0
    %v225 = vpop.f32.mrb[0].mxu0
    %226 = vdwg.mxu0
    %228 = vset.pattern.permute.xlu0 127
    %229 = vperm.xlu0 %228, %v180
    %v230 = vpop.permute.xlu0 %229
    %233 = vset.pattern.permute.xlu0 127
    %234 = vperm.xlu0 %233, %v183
    %v235 = vpop.permute.xlu0 %234
    %v237 = vlaneseq
    %v238 = vshrl.u32 %v237, 7
    %v239 = vsub.s32 0, %v238
    %v240 = vrot.slane %v222, %v239
    %v241 = vadd.f32 %v230, %v240
    %v242 = vadd.f32 %v235, %v240
    %vm243 = vcmp.gt.f32.partialorder %v241, 0.0
    %vm244 = vcmp.gt.f32.partialorder %v242, 0.0
    %v245 = vmul.f32 %v241, 0.2
    %v246 = vmul.f32 %v242, 0.2
    %v247 = vsel %vm243, %v241, %v245
    %v248 = vsel %vm244, %v242, %v246
    %v249 = vsel %vm64, 65537, 0
    %v250 = vsel %vm65, 65537, 0
    %v251 = vunpack.c.l.b16 %v249
    %v252 = vunpack.c.l.b16 %v250
    %vm253 = vcmp.ne.s32.totalorder %v251, 0
    %vm254 = vcmp.ne.s32.totalorder %v252, 0
    %v255 = vsel %vm253, %v247, -1e+30
    %v256 = vsel %vm254, %v248, -1e+30
    %vm257 = vcmask 130048
    %v258 = vsel %vm257, %v255, -inf
    %259 = vmax.xlane.f32.xlu0 %v258
    %v260 = vpop.xlane.xlu0 %259
    %v261 = vsel %vm257, %v256, -inf
    %262 = vmax.xlane.f32.xlu0 %v261
    %v263 = vpop.xlane.xlu0 %262
    %v264 = vsub.f32 %v255, %v260
    %v265 = vsub.f32 %v256, %v263
    %v266 = vmul.f32 %v264, 1.442695
    %v267 = vpow.pop %v266
    %v268 = vmul.f32 %v265, 1.442695
    %v269 = vpow.pop %v268
    %v270 = vsel %vm257, %v267, 0.0
    %271 = vadd.xlane.f32.xlu0 %v270
    %v272 = vpop.xlane.xlu0 %271
    %v273 = vsel %vm257, %v269, 0.0
    %274 = vadd.xlane.f32.xlu0 %v273
    %v275 = vpop.xlane.xlu0 %274
    %v276 = vrcp.pop %v272
    %v277 = vrcp.pop %v275
    %v278 = vmul.f32 %v267, %v276
    %v279 = vmul.f32 %v269, %v277
    %v280 = vpack.c.bf16 %v279, %v278
    %v282 = vlaneseq
    %v283 = vshrl.u32 %v282, 7
    %v284 = vsub.s32 0, %v283
    %v285 = vrot.slane %v90, %v284
    %v288 = vsel %vm257, %v280, 0
    %290 = vmatprep.subr.bf16.mxu0 0
    %291 = vmatpush1.bf16.msra.mxu0 %v186
    %292 = vmatprep.subr.bf16.mxu0 0
    %293 = vmatpush1.bf16.msra.mxu0 0
    %294 = vmatprep.subr.bf16.mxu0 0
    %295 = vmatpush1.bf16.msra.mxu0 0
    %296 = vmatprep.subr.bf16.mxu0 0
    %297 = vmatpush1.bf16.msra.mxu0 0
    %298 = vmatprep.subr.bf16.mxu0 0
    %299 = vmatpush1.bf16.msra.mxu0 0
    %300 = vmatprep.subr.bf16.mxu0 0
    %301 = vmatpush1.bf16.msra.mxu0 0
    %302 = vmatprep.subr.bf16.mxu0 0
    %303 = vmatpush1.bf16.msra.mxu0 0
    %304 = vmatprep.subr.bf16.mxu0 0
    %305 = vmatpush1.bf16.msra.mxu0 0
    %306 = vmatprep.subr.bf16.mxu0 0
    %307 = vmatpush1.bf16.msra.mxu0 0
    %308 = vmatprep.subr.bf16.mxu0 0
    %309 = vmatpush1.bf16.msra.mxu0 0
    %310 = vmatprep.subr.bf16.mxu0 0
    %311 = vmatpush1.bf16.msra.mxu0 0
    %312 = vmatprep.subr.bf16.mxu0 0
    %313 = vmatpush1.bf16.msra.mxu0 0
    %314 = vmatprep.subr.bf16.mxu0 0
    %315 = vmatpush1.bf16.msra.mxu0 0
    %316 = vmatprep.subr.bf16.mxu0 0
    %317 = vmatpush1.bf16.msra.mxu0 0
    %318 = vmatprep.subr.bf16.mxu0 0
    %319 = vmatpush1.bf16.msra.mxu0 0
    %320 = vmatprep.subr.bf16.mxu0 0
    %321 = vmatpush1.bf16.msra.mxu0 0
    %322 = vmatprep.mubr.bf16.mxu0 0
    %323 = vmatmul.mubr.bf16.gmra.mrb[0].mxu0 %v288
    %v324 = vpop.f32.mrb[0].mxu0
    %v325 = vadd.f32 %v285, %v324
    %v326 = vpop.f32.mrb[0].mxu0
    %v327 = vpop.f32.mrb[0].mxu0
    %v328 = vadd.f32 %v285, %v327
    %v329 = vpop.f32.mrb[0].mxu0
    %330 = vdwg.mxu0
    %v331 = vmax.f32 %v325, 0.0
    %v332 = vmax.f32 %v328, 0.0
    %v333 = vpack.c.bf16 %v332, %v331
    %s334 = scalar_lea.vmem [#allocation7], 64
    %v335 = vld [vmem:[%s334] sm:$0xf]
    %v336 = vld [vmem:[%s334 + $0x4] sm:$0xf]
    %v337 = vld [vmem:[%s334 + $0x8] sm:$0xf]
    %v338 = vld [vmem:[%s334 + $0xc] sm:$0xf]
    %v339 = vld [vmem:[%s334 + $0x10] sm:$0xf]
    %v340 = vld [vmem:[%s334 + $0x14] sm:$0xf]
    %v341 = vld [vmem:[%s334 + $0x18] sm:$0xf]
    %v342 = vld [vmem:[%s334 + $0x1c] sm:$0xf]
    %v343 = vld [vmem:[%s334 + $0x20] sm:$0xf]
    %v344 = vld [vmem:[%s334 + $0x24] sm:$0xf]
    %v345 = vld [vmem:[%s334 + $0x28] sm:$0xf]
    %v346 = vld [vmem:[%s334 + $0x2c] sm:$0xf]
    %v347 = vld [vmem:[%s334 + $0x30] sm:$0xf]
    %v348 = vld [vmem:[%s334 + $0x34] sm:$0xf]
    %v349 = vld [vmem:[%s334 + $0x38] sm:$0xf]
    %v350 = vld [vmem:[%s334 + $0x3c] sm:$0xf]
    %s351 = scalar_lea.vmem %s3, 1
    %v352 = vld [vmem:[%s351] sm:$0x1]
    %v369 = vunpack.c.l.b16 %v335
    %v370 = vunpack.c.l.b16 %v336
    %v371 = vunpack.c.l.b16 %v337
    %v372 = vunpack.c.l.b16 %v338
    %v373 = vunpack.c.l.b16 %v339
    %v374 = vunpack.c.l.b16 %v340
    %v375 = vunpack.c.l.b16 %v341
    %v376 = vunpack.c.l.b16 %v342
    %v377 = vunpack.c.l.b16 %v343
    %v378 = vunpack.c.l.b16 %v344
    %v379 = vunpack.c.l.b16 %v345
    %v380 = vunpack.c.l.b16 %v346
    %v381 = vunpack.c.l.b16 %v347
    %v382 = vunpack.c.l.b16 %v348
    %v383 = vunpack.c.l.b16 %v349
    %v384 = vunpack.c.l.b16 %v350
    %v385 = vpack.c.b16 %v370, %v369
    %v386 = vpack.c.b16 %v372, %v371
    %v387 = vpack.c.b16 %v374, %v373
    %v388 = vpack.c.b16 %v376, %v375
    %v389 = vpack.c.b16 %v378, %v377
    %v390 = vpack.c.b16 %v380, %v379
    %v391 = vpack.c.b16 %v382, %v381
    %v392 = vpack.c.b16 %v384, %v383
    %401 = vmatprep.subr.bf16.mxu0 0
    %402 = vmatpush1.bf16.msra.mxu0 %v385
    %403 = vmatprep.subr.bf16.mxu0 0
    %404 = vmatpush1.bf16.msra.mxu0 %v386
    %405 = vmatprep.subr.bf16.mxu0 0
    %406 = vmatpush1.bf16.msra.mxu0 %v387
    %407 = vmatprep.subr.bf16.mxu0 0
    %408 = vmatpush1.bf16.msra.mxu0 %v388
    %409 = vmatprep.subr.bf16.mxu0 0
    %410 = vmatpush1.bf16.msra.mxu0 %v389
    %411 = vmatprep.subr.bf16.mxu0 0
    %412 = vmatpush1.bf16.msra.mxu0 %v390
    %413 = vmatprep.subr.bf16.mxu0 0
    %414 = vmatpush1.bf16.msra.mxu0 %v391
    %415 = vmatprep.subr.bf16.mxu0 0
    %416 = vmatpush1.bf16.msra.mxu0 %v392
    %417 = vmatprep.subr.bf16.mxu0 0
    %418 = vmatpush1.bf16.msra.mxu0 0
    %419 = vmatprep.subr.bf16.mxu0 0
    %420 = vmatpush1.bf16.msra.mxu0 0
    %421 = vmatprep.subr.bf16.mxu0 0
    %422 = vmatpush1.bf16.msra.mxu0 0
    %423 = vmatprep.subr.bf16.mxu0 0
    %424 = vmatpush1.bf16.msra.mxu0 0
    %425 = vmatprep.subr.bf16.mxu0 0
    %426 = vmatpush1.bf16.msra.mxu0 0
    %427 = vmatprep.subr.bf16.mxu0 0
    %428 = vmatpush1.bf16.msra.mxu0 0
    %429 = vmatprep.subr.bf16.mxu0 0
    %430 = vmatpush1.bf16.msra.mxu0 0
    %431 = vmatprep.subr.bf16.mxu0 0
    %432 = vmatpush1.bf16.msra.mxu0 0
    %433 = vmatprep.mubr.bf16.mxu0 0
    %434 = vmatmul.mubr.bf16.gmra.mrb[0].mxu0 %v333
    %v435 = vpop.f32.mrb[0].mxu0
    %v436 = vadd.f32 0.0, %v435
    %v437 = vpop.f32.mrb[0].mxu0
    %v438 = vpop.f32.mrb[0].mxu0
    %v439 = vadd.f32 0.0, %v438
    %v440 = vpop.f32.mrb[0].mxu0
    %441 = vdwg.mxu0
    %v442 = vpack.c.bf16 %v439, %v436
    %443 = vmatprep.subr.bf16.mxu0 0
    %444 = vmatpush1.bf16.xpose.msra.mxu0 %v442
    %445 = vmatprep.subr.bf16.mxu0 0
    %446 = vmatpush1.bf16.xpose.msra.mxu0 0
    %447 = vmatprep.subr.bf16.mxu0 0
    %448 = vmatpush1.bf16.xpose.msra.mxu0 0
    %449 = vmatprep.subr.bf16.mxu0 0
    %450 = vmatpush1.bf16.xpose.msra.mxu0 0
    %451 = vmatprep.subr.bf16.mxu0 0
    %452 = vmatpush1.bf16.xpose.msra.mxu0 0
    %453 = vmatprep.subr.bf16.mxu0 0
    %454 = vmatpush1.bf16.xpose.msra.mxu0 0
    %455 = vmatprep.subr.bf16.mxu0 0
    %456 = vmatpush1.bf16.xpose.msra.mxu0 0
    %457 = vmatprep.subr.bf16.mxu0 0
    %458 = vmatpush1.bf16.xpose.msra.mxu0 0
    %459 = vmatprep.subr.bf16.mxu0 0
    %460 = vmatpush1.bf16.xpose.msra.mxu0 0
    %461 = vmatprep.subr.bf16.mxu0 0
    %462 = vmatpush1.bf16.xpose.msra.mxu0 0
    %463 = vmatprep.subr.bf16.mxu0 0
    %464 = vmatpush1.bf16.xpose.msra.mxu0 0
    %465 = vmatprep.subr.bf16.mxu0 0
    %466 = vmatpush1.bf16.xpose.msra.mxu0 0
    %467 = vmatprep.subr.bf16.mxu0 0
    %468 = vmatpush1.bf16.xpose.msra.mxu0 0
    %469 = vmatprep.subr.bf16.mxu0 0
    %470 = vmatpush1.bf16.xpose.msra.mxu0 0
    %471 = vmatprep.subr.bf16.mxu0 0
    %472 = vmatpush1.bf16.xpose.msra.mxu0 0
    %473 = vmatprep.subr.bf16.mxu0 0
    %474 = vmatpush1.bf16.xpose.msra.mxu0 0
    %475 = vmatprep.mubr.bf16.mxu0 0
    %476 = vmatmul.mubr.bf16.gmra.mrb[0].mxu0 %v71
    %v477 = vpop.f32.mrb[0].mxu0
    %v478 = vadd.f32 0.0, %v477
    %v479 = vpop.f32.mrb[0].mxu0
    %v480 = vpop.f32.mrb[0].mxu0
    %v481 = vpop.f32.mrb[0].mxu0
    %482 = vdwg.mxu0
    %484 = vset.pattern.permute.xlu0 127
    %485 = vperm.xlu0 %484, %v436
    %v486 = vpop.permute.xlu0 %485
    %489 = vset.pattern.permute.xlu0 127
    %490 = vperm.xlu0 %489, %v439
    %v491 = vpop.permute.xlu0 %490
    %v493 = vlaneseq
    %v494 = vshrl.u32 %v493, 7
    %v495 = vsub.s32 0, %v494
    %v496 = vrot.slane %v478, %v495
    %v497 = vadd.f32 %v486, %v496
    %v498 = vadd.f32 %v491, %v496
    %vm499 = vcmp.gt.f32.partialorder %v497, 0.0
    %vm500 = vcmp.gt.f32.partialorder %v498, 0.0
    %v501 = vmul.f32 %v497, 0.2
    %v502 = vmul.f32 %v498, 0.2
    %v503 = vsel %vm499, %v497, %v501
    %v504 = vsel %vm500, %v498, %v502
    %v505 = vsel %vm253, %v503, -1e+30
    %v506 = vsel %vm254, %v504, -1e+30
    %v507 = vsel %vm257, %v505, -inf
    %508 = vmax.xlane.f32.xlu0 %v507
    %v509 = vpop.xlane.xlu0 %508
    %v510 = vsel %vm257, %v506, -inf
    %511 = vmax.xlane.f32.xlu0 %v510
    %v512 = vpop.xlane.xlu0 %511
    %v513 = vsub.f32 %v505, %v509
    %v514 = vsub.f32 %v506, %v512
    %v515 = vmul.f32 %v513, 1.442695
    %v516 = vpow.pop %v515
    %v517 = vmul.f32 %v514, 1.442695
    %v518 = vpow.pop %v517
    %v519 = vsel %vm257, %v516, 0.0
    %520 = vadd.xlane.f32.xlu0 %v519
    %v521 = vpop.xlane.xlu0 %520
    %v522 = vsel %vm257, %v518, 0.0
    %523 = vadd.xlane.f32.xlu0 %v522
    %v524 = vpop.xlane.xlu0 %523
    %v525 = vrcp.pop %v521
    %v526 = vrcp.pop %v524
    %v527 = vmul.f32 %v516, %v525
    %v528 = vmul.f32 %v518, %v526
    %v529 = vpack.c.bf16 %v528, %v527
    %v531 = vlaneseq
    %v532 = vshrl.u32 %v531, 7
    %v533 = vsub.s32 0, %v532
    %v534 = vrot.slane %v352, %v533
    %v537 = vsel %vm257, %v529, 0
    %539 = vmatprep.subr.bf16.mxu0 0
    %540 = vmatpush1.bf16.msra.mxu0 %v442
    %541 = vmatprep.subr.bf16.mxu0 0
    %542 = vmatpush1.bf16.msra.mxu0 0
    %543 = vmatprep.subr.bf16.mxu0 0
    %544 = vmatpush1.bf16.msra.mxu0 0
    %545 = vmatprep.subr.bf16.mxu0 0
    %546 = vmatpush1.bf16.msra.mxu0 0
    %547 = vmatprep.subr.bf16.mxu0 0
    %548 = vmatpush1.bf16.msra.mxu0 0
    %549 = vmatprep.subr.bf16.mxu0 0
    %550 = vmatpush1.bf16.msra.mxu0 0
    %551 = vmatprep.subr.bf16.mxu0 0
    %552 = vmatpush1.bf16.msra.mxu0 0
    %553 = vmatprep.subr.bf16.mxu0 0
    %554 = vmatpush1.bf16.msra.mxu0 0
    %555 = vmatprep.subr.bf16.mxu0 0
    %556 = vmatpush1.bf16.msra.mxu0 0
    %557 = vmatprep.subr.bf16.mxu0 0
    %558 = vmatpush1.bf16.msra.mxu0 0
    %559 = vmatprep.subr.bf16.mxu0 0
    %560 = vmatpush1.bf16.msra.mxu0 0
    %561 = vmatprep.subr.bf16.mxu0 0
    %562 = vmatpush1.bf16.msra.mxu0 0
    %563 = vmatprep.subr.bf16.mxu0 0
    %564 = vmatpush1.bf16.msra.mxu0 0
    %565 = vmatprep.subr.bf16.mxu0 0
    %566 = vmatpush1.bf16.msra.mxu0 0
    %567 = vmatprep.subr.bf16.mxu0 0
    %568 = vmatpush1.bf16.msra.mxu0 0
    %569 = vmatprep.subr.bf16.mxu0 0
    %570 = vmatpush1.bf16.msra.mxu0 0
    %571 = vmatprep.mubr.bf16.mxu0 0
    %572 = vmatmul.mubr.bf16.gmra.mrb[0].mxu0 %v537
    %v573 = vpop.f32.mrb[0].mxu0
    %v574 = vadd.f32 %v534, %v573
    %v575 = vpop.f32.mrb[0].mxu0
    %v576 = vpop.f32.mrb[0].mxu0
    %v577 = vadd.f32 %v534, %v576
    %v578 = vpop.f32.mrb[0].mxu0
    %579 = vdwg.mxu0
    %v580 = vmax.f32 %v574, 0.0
    %v581 = vmax.f32 %v577, 0.0
    %v582 = vpack.c.bf16 %v581, %v580
    %s583 = scalar_lea.vmem [#allocation7], 128
    %v584 = vld [vmem:[%s583] sm:$0xf]
    %v585 = vld [vmem:[%s583 + $0x4] sm:$0xf]
    %v586 = vld [vmem:[%s583 + $0x8] sm:$0xf]
    %v587 = vld [vmem:[%s583 + $0xc] sm:$0xf]
    %v588 = vld [vmem:[%s583 + $0x10] sm:$0xf]
    %v589 = vld [vmem:[%s583 + $0x14] sm:$0xf]
    %v590 = vld [vmem:[%s583 + $0x18] sm:$0xf]
    %v591 = vld [vmem:[%s583 + $0x1c] sm:$0xf]
    %v592 = vld [vmem:[%s583 + $0x20] sm:$0xf]
    %v593 = vld [vmem:[%s583 + $0x24] sm:$0xf]
    %v594 = vld [vmem:[%s583 + $0x28] sm:$0xf]
    %v595 = vld [vmem:[%s583 + $0x2c] sm:$0xf]
    %v596 = vld [vmem:[%s583 + $0x30] sm:$0xf]
    %v597 = vld [vmem:[%s583 + $0x34] sm:$0xf]
    %v598 = vld [vmem:[%s583 + $0x38] sm:$0xf]
    %v599 = vld [vmem:[%s583 + $0x3c] sm:$0xf]
    %s600 = scalar_lea.vmem %s3, 2
    %v601 = vld [vmem:[%s600] sm:$0x1]
    %v618 = vunpack.c.l.b16 %v584
    %v619 = vunpack.c.l.b16 %v585
    %v620 = vunpack.c.l.b16 %v586
    %v621 = vunpack.c.l.b16 %v587
    %v622 = vunpack.c.l.b16 %v588
    %v623 = vunpack.c.l.b16 %v589
    %v624 = vunpack.c.l.b16 %v590
    %v625 = vunpack.c.l.b16 %v591
    %v626 = vunpack.c.l.b16 %v592
    %v627 = vunpack.c.l.b16 %v593
    %v628 = vunpack.c.l.b16 %v594
    %v629 = vunpack.c.l.b16 %v595
    %v630 = vunpack.c.l.b16 %v596
    %v631 = vunpack.c.l.b16 %v597
    %v632 = vunpack.c.l.b16 %v598
    %v633 = vunpack.c.l.b16 %v599
    %v634 = vpack.c.b16 %v619, %v618
    %v635 = vpack.c.b16 %v621, %v620
    %v636 = vpack.c.b16 %v623, %v622
    %v637 = vpack.c.b16 %v625, %v624
    %v638 = vpack.c.b16 %v627, %v626
    %v639 = vpack.c.b16 %v629, %v628
    %v640 = vpack.c.b16 %v631, %v630
    %v641 = vpack.c.b16 %v633, %v632
    %650 = vmatprep.subr.bf16.mxu0 0
    %651 = vmatpush1.bf16.msra.mxu0 %v634
    %652 = vmatprep.subr.bf16.mxu0 0
    %653 = vmatpush1.bf16.msra.mxu0 %v635
    %654 = vmatprep.subr.bf16.mxu0 0
    %655 = vmatpush1.bf16.msra.mxu0 %v636
    %656 = vmatprep.subr.bf16.mxu0 0
    %657 = vmatpush1.bf16.msra.mxu0 %v637
    %658 = vmatprep.subr.bf16.mxu0 0
    %659 = vmatpush1.bf16.msra.mxu0 %v638
    %660 = vmatprep.subr.bf16.mxu0 0
    %661 = vmatpush1.bf16.msra.mxu0 %v639
    %662 = vmatprep.subr.bf16.mxu0 0
    %663 = vmatpush1.bf16.msra.mxu0 %v640
    %664 = vmatprep.subr.bf16.mxu0 0
    %665 = vmatpush1.bf16.msra.mxu0 %v641
    %666 = vmatprep.subr.bf16.mxu0 0
    %667 = vmatpush1.bf16.msra.mxu0 0
    %668 = vmatprep.subr.bf16.mxu0 0
    %669 = vmatpush1.bf16.msra.mxu0 0
    %670 = vmatprep.subr.bf16.mxu0 0
    %671 = vmatpush1.bf16.msra.mxu0 0
    %672 = vmatprep.subr.bf16.mxu0 0
    %673 = vmatpush1.bf16.msra.mxu0 0
    %674 = vmatprep.subr.bf16.mxu0 0
    %675 = vmatpush1.bf16.msra.mxu0 0
    %676 = vmatprep.subr.bf16.mxu0 0
    %677 = vmatpush1.bf16.msra.mxu0 0
    %678 = vmatprep.subr.bf16.mxu0 0
    %679 = vmatpush1.bf16.msra.mxu0 0
    %680 = vmatprep.subr.bf16.mxu0 0
    %681 = vmatpush1.bf16.msra.mxu0 0
    %682 = vmatprep.mubr.bf16.mxu0 0
    %683 = vmatmul.mubr.bf16.gmra.mrb[0].mxu0 %v582
    %v684 = vpop.f32.mrb[0].mxu0
    %v685 = vadd.f32 0.0, %v684
    %v686 = vpop.f32.mrb[0].mxu0
    %v687 = vpop.f32.mrb[0].mxu0
    %v688 = vadd.f32 0.0, %v687
    %v689 = vpop.f32.mrb[0].mxu0
    %690 = vdwg.mxu0
    %v691 = vpack.c.bf16 %v688, %v685
    %692 = vmatprep.subr.bf16.mxu0 0
    %693 = vmatpush1.bf16.xpose.msra.mxu0 %v691
    %694 = vmatprep.subr.bf16.mxu0 0
    %695 = vmatpush1.bf16.xpose.msra.mxu0 0
    %696 = vmatprep.subr.bf16.mxu0 0
    %697 = vmatpush1.bf16.xpose.msra.mxu0 0
    %698 = vmatprep.subr.bf16.mxu0 0
    %699 = vmatpush1.bf16.xpose.msra.mxu0 0
    %700 = vmatprep.subr.bf16.mxu0 0
    %701 = vmatpush1.bf16.xpose.msra.mxu0 0
    %702 = vmatprep.subr.bf16.mxu0 0
    %703 = vmatpush1.bf16.xpose.msra.mxu0 0
    %704 = vmatprep.subr.bf16.mxu0 0
    %705 = vmatpush1.bf16.xpose.msra.mxu0 0
    %706 = vmatprep.subr.bf16.mxu0 0
    %707 = vmatpush1.bf16.xpose.msra.mxu0 0
    %708 = vmatprep.subr.bf16.mxu0 0
    %709 = vmatpush1.bf16.xpose.msra.mxu0 0
    %710 = vmatprep.subr.bf16.mxu0 0
    %711 = vmatpush1.bf16.xpose.msra.mxu0 0
    %712 = vmatprep.subr.bf16.mxu0 0
    %713 = vmatpush1.bf16.xpose.msra.mxu0 0
    %714 = vmatprep.subr.bf16.mxu0 0
    %715 = vmatpush1.bf16.xpose.msra.mxu0 0
    %716 = vmatprep.subr.bf16.mxu0 0
    %717 = vmatpush1.bf16.xpose.msra.mxu0 0
    %718 = vmatprep.subr.bf16.mxu0 0
    %719 = vmatpush1.bf16.xpose.msra.mxu0 0
    %720 = vmatprep.subr.bf16.mxu0 0
    %721 = vmatpush1.bf16.xpose.msra.mxu0 0
    %722 = vmatprep.subr.bf16.mxu0 0
    %723 = vmatpush1.bf16.xpose.msra.mxu0 0
    %724 = vmatprep.mubr.bf16.mxu0 0
    %725 = vmatmul.mubr.bf16.gmra.mrb[0].mxu0 %v71
    %v726 = vpop.f32.mrb[0].mxu0
    %v727 = vadd.f32 0.0, %v726
    %v728 = vpop.f32.mrb[0].mxu0
    %v729 = vpop.f32.mrb[0].mxu0
    %v730 = vpop.f32.mrb[0].mxu0
    %731 = vdwg.mxu0
    %733 = vset.pattern.permute.xlu0 127
    %734 = vperm.xlu0 %733, %v685
    %v735 = vpop.permute.xlu0 %734
    %738 = vset.pattern.permute.xlu0 127
    %739 = vperm.xlu0 %738, %v688
    %v740 = vpop.permute.xlu0 %739
    %v742 = vlaneseq
    %v743 = vshrl.u32 %v742, 7
    %v744 = vsub.s32 0, %v743
    %v745 = vrot.slane %v727, %v744
    %v746 = vadd.f32 %v735, %v745
    %v747 = vadd.f32 %v740, %v745
    %vm748 = vcmp.gt.f32.partialorder %v746, 0.0
    %vm749 = vcmp.gt.f32.partialorder %v747, 0.0
    %v750 = vmul.f32 %v746, 0.2
    %v751 = vmul.f32 %v747, 0.2
    %v752 = vsel %vm748, %v746, %v750
    %v753 = vsel %vm749, %v747, %v751
    %v754 = vsel %vm253, %v752, -1e+30
    %v755 = vsel %vm254, %v753, -1e+30
    %v756 = vsel %vm257, %v754, -inf
    %757 = vmax.xlane.f32.xlu0 %v756
    %v758 = vpop.xlane.xlu0 %757
    %v759 = vsel %vm257, %v755, -inf
    %760 = vmax.xlane.f32.xlu0 %v759
    %v761 = vpop.xlane.xlu0 %760
    %v762 = vsub.f32 %v754, %v758
    %v763 = vsub.f32 %v755, %v761
    %v764 = vmul.f32 %v762, 1.442695
    %v765 = vpow.pop %v764
    %v766 = vmul.f32 %v763, 1.442695
    %v767 = vpow.pop %v766
    %v768 = vsel %vm257, %v765, 0.0
    %769 = vadd.xlane.f32.xlu0 %v768
    %v770 = vpop.xlane.xlu0 %769
    %v771 = vsel %vm257, %v767, 0.0
    %772 = vadd.xlane.f32.xlu0 %v771
    %v773 = vpop.xlane.xlu0 %772
    %v774 = vrcp.pop %v770
    %v775 = vrcp.pop %v773
    %v776 = vmul.f32 %v765, %v774
    %v777 = vmul.f32 %v767, %v775
    %v778 = vpack.c.bf16 %v777, %v776
    %v780 = vlaneseq
    %v781 = vshrl.u32 %v780, 7
    %v782 = vsub.s32 0, %v781
    %v783 = vrot.slane %v601, %v782
    %v786 = vsel %vm257, %v778, 0
    %788 = vmatprep.subr.bf16.mxu0 0
    %789 = vmatpush1.bf16.msra.mxu0 %v691
    %790 = vmatprep.subr.bf16.mxu0 0
    %791 = vmatpush1.bf16.msra.mxu0 0
    %792 = vmatprep.subr.bf16.mxu0 0
    %793 = vmatpush1.bf16.msra.mxu0 0
    %794 = vmatprep.subr.bf16.mxu0 0
    %795 = vmatpush1.bf16.msra.mxu0 0
    %796 = vmatprep.subr.bf16.mxu0 0
    %797 = vmatpush1.bf16.msra.mxu0 0
    %798 = vmatprep.subr.bf16.mxu0 0
    %799 = vmatpush1.bf16.msra.mxu0 0
    %800 = vmatprep.subr.bf16.mxu0 0
    %801 = vmatpush1.bf16.msra.mxu0 0
    %802 = vmatprep.subr.bf16.mxu0 0
    %803 = vmatpush1.bf16.msra.mxu0 0
    %804 = vmatprep.subr.bf16.mxu0 0
    %805 = vmatpush1.bf16.msra.mxu0 0
    %806 = vmatprep.subr.bf16.mxu0 0
    %807 = vmatpush1.bf16.msra.mxu0 0
    %808 = vmatprep.subr.bf16.mxu0 0
    %809 = vmatpush1.bf16.msra.mxu0 0
    %810 = vmatprep.subr.bf16.mxu0 0
    %811 = vmatpush1.bf16.msra.mxu0 0
    %812 = vmatprep.subr.bf16.mxu0 0
    %813 = vmatpush1.bf16.msra.mxu0 0
    %814 = vmatprep.subr.bf16.mxu0 0
    %815 = vmatpush1.bf16.msra.mxu0 0
    %816 = vmatprep.subr.bf16.mxu0 0
    %817 = vmatpush1.bf16.msra.mxu0 0
    %818 = vmatprep.subr.bf16.mxu0 0
    %819 = vmatpush1.bf16.msra.mxu0 0
    %820 = vmatprep.mubr.bf16.mxu0 0
    %821 = vmatmul.mubr.bf16.gmra.mrb[0].mxu0 %v786
    %v822 = vpop.f32.mrb[0].mxu0
    %v823 = vadd.f32 %v783, %v822
    %v824 = vpop.f32.mrb[0].mxu0
    %v825 = vpop.f32.mrb[0].mxu0
    %v826 = vadd.f32 %v783, %v825
    %v827 = vpop.f32.mrb[0].mxu0
    %828 = vdwg.mxu0
    %829 = vst [vmem:[#allocation8] sm:$0xff] %v823
    %830 = vst [vmem:[#allocation8 + $0x8] sm:$0xff] %v826
    // Predicated region
    $region30: #{tpu_custom_call.1} parent=1 // pred_check
      _
    $region31: #{tpu_custom_call.1} parent=1 // pred_check_branch
      %832 = sbr.rel (0) target = $region33
    $region32: #{tpu_custom_call.1} parent=1 // pred_region
      %s834 = ssub.s32 256, 256
      %835 = vsyncadd [#allocation4], %s834
      %s836 = sshll.u32 [#allocation8], 4
      %s837 = int_to_ptr.vmem [resolvable:$true] %s836
      %842 = dma.vmem_to_hbm [thread:$0]  %s837, 256, %s4, [#allocation4], 128, 128, 8
    $region33: #{tpu_custom_call.1} parent=1 // pred_fallthru
      _
    // Predicated region
    $region34: #{tpu_custom_call.1} parent=1 // pred_check
      _
    $region35: #{tpu_custom_call.1} parent=1 // pred_check_branch
      %844 = sbr.rel (0) target = $region37
    $region36: #{tpu_custom_call.1} parent=1 // pred_region
      %845 = dma.done [#allocation4], 256
    $region37: #{tpu_custom_call.1} parent=1 // pred_fallthru
      _
    %846 = vsyncpa [#allocation3], 1
    %847 = vsyncpa [#allocation6], 1
    %848 = vsyncpa [#allocation4], 1

</llo_original>
